<compile_context>
chip_gen: v7x
topology: tpu7x:2x2x1
jax: 0.10.0
libtpu: 0.0.40
codegen_flags: <defaults>
</compile_context>

<pallas_src>
import functools

import jax
import jax.numpy as jnp
from jax import lax
from jax.experimental import pallas as pl
from jax.experimental.pallas import tpu as pltpu


# --------------------------------------------------------------------------- #
# helpers
# --------------------------------------------------------------------------- #
def _round_up(x, m):
    return (x + m - 1) // m * m


def _largest_divisor_tile(total, preferred, quantum):
    """Largest multiple of `quantum` dividing `total`, at most `preferred`."""
    if total <= preferred:
        return total
    cand = (preferred // quantum) * quantum
    while cand >= quantum:
        if total % cand == 0:
            return cand
        cand -= quantum
    return total


# --------------------------------------------------------------------------- #
# Kernel 1: projection + gate activations  (parallel, MXU-bound)
# --------------------------------------------------------------------------- #
def _sru_gates_kernel(x_ref, w_ref, b_ref, f_ref, zf_ref, r_ref,
                      *, time_block, seq_len, mask_time):
    # x_ref: (Tb, Bp, K)   w_ref: (3, K, tn)   b_ref: (2, tn)
    # outputs f/zf/r: (Tb, Bp, tn)
    tb, bp, k = x_ref.shape
    n = f_ref.shape[-1]
    x2 = x_ref[...].reshape(tb * bp, k)            # free reshape (lane dim kept)

    z = jnp.dot(x2, w_ref[0], preferred_element_type=jnp.float32).reshape(tb, bp, n)
    f_pre = jnp.dot(x2, w_ref[1], preferred_element_type=jnp.float32).reshape(tb, bp, n)
    r_pre = jnp.dot(x2, w_ref[2], preferred_element_type=jnp.float32).reshape(tb, bp, n)

    # Fuse bias + sigmoid + (1-f)*z here (EUP/VPU hidden under the MXU) so the
    # sequential recurrence kernel only does one fma on its critical path.
    f_t = jax.nn.sigmoid(f_pre + b_ref[0:1, :])
    r_t = jax.nn.sigmoid(r_pre + b_ref[1:2, :])
    zf_t = (1.0 - f_t) * z

    if mask_time:
        # Padded timesteps: f=1, zf=0  =>  c passes through unchanged, so the
        # final cell state is exact without any masking in the serial kernel.
        t0 = pl.program_id(1) * time_block
        ids = lax.broadcasted_iota(jnp.int32, (tb, bp, n), 0)
        valid = (t0 + ids) < seq_len
        f_t = jnp.where(valid, f_t, 1.0)
        zf_t = jnp.where(valid, zf_t, 0.0)

    f_ref[...] = f_t
    zf_ref[...] = zf_t
    r_ref[...] = r_t


def _sru_gates(x_p, w_p, b_p, seq_len, time_block, n_tile):
    l_pad, b_pad, h_pad = x_p.shape
    grid = (h_pad // n_tile, l_pad // time_block)
    gate_shape = jax.ShapeDtypeStruct((l_pad, b_pad, h_pad), jnp.float32)
    gate_spec = pl.BlockSpec((time_block, b_pad, n_tile), lambda n, l: (l, 0, n))
    kernel = functools.partial(_sru_gates_kernel, time_block=time_block,
                               seq_len=seq_len, mask_time=(l_pad != seq_len))
    return pl.pallas_call(
        kernel,
        out_shape=(gate_shape, gate_shape, gate_shape),
        grid_spec=pltpu.PrefetchScalarGridSpec(
            num_scalar_prefetch=0,
            grid=grid,
            in_specs=[
                # x block is constant across n (re-used), streamed across l.
                pl.BlockSpec((time_block, b_pad, h_pad), lambda n, l: (l, 0, 0)),
                # weight/bias blocks constant across l -> not re-fetched per step.
                pl.BlockSpec((3, h_pad, n_tile), lambda n, l: (0, 0, n)),
                pl.BlockSpec((2, n_tile), lambda n, l: (0, n)),
            ],
            out_specs=[gate_spec, gate_spec, gate_spec],
        ),
        compiler_params=pltpu.CompilerParams(
            dimension_semantics=("parallel", "parallel"),
        ),
    )(x_p, w_p, b_p)


# --------------------------------------------------------------------------- #
# Kernel 2: sequential recurrence  (VPU/EUP, time axis "arbitrary")
# --------------------------------------------------------------------------- #
def _sru_recurrence_kernel(f_ref, zf_ref, r_ref, x_ref, h_ref, c_ref,
                           *, time_block):
    # f/zf/r/x: (Tb, Bt, H)   h: (Tb, Bt, H)   c: (Bt, H) resident accumulator
    @pl.when(pl.program_id(1) == 0)
    def _():
        c_ref[...] = jnp.zeros_like(c_ref)

    def step(i, c_prev):
        # Critical path: one fused multiply-add per timestep.
        c_t = f_ref[i] * c_prev + zf_ref[i]
        r_t = r_ref[i]
        # tanh / highway mix are off the recurrence's critical path.
        h_ref[i] = r_t * jnp.tanh(c_t) + (1.0 - r_t) * x_ref[i]
        return c_t

    # Carry c in registers across the unrolled time block; single c store.
    c_ref[...] = lax.fori_loop(0, time_block, step, c_ref[...], unroll=True)


def _sru_recurrence(f_t, zf_t, r_t, x_p, time_block, batch_tile):
    l_pad, b_pad, h_pad = x_p.shape
    grid = (b_pad // batch_tile, l_pad // time_block)
    gate_spec = pl.BlockSpec((time_block, batch_tile, h_pad),
                             lambda b, l: (l, b, 0))
    kernel = functools.partial(_sru_recurrence_kernel, time_block=time_block)
    return pl.pallas_call(
        kernel,
        out_shape=(
            jax.ShapeDtypeStruct((l_pad, b_pad, h_pad), jnp.float32),
            jax.ShapeDtypeStruct((b_pad, h_pad), jnp.float32),
        ),
        grid_spec=pltpu.PrefetchScalarGridSpec(
            num_scalar_prefetch=0,
            grid=grid,
            in_specs=[
                gate_spec,                                     # f_t
                gate_spec,                                     # (1-f_t)*z
                gate_spec,                                     # r_t
                gate_spec,                                     # x (highway)
            ],
            out_specs=[
                gate_spec,                                          # h
                pl.BlockSpec((batch_tile, h_pad), lambda b, l: (b, 0)),  # c
            ],
        ),
        compiler_params=pltpu.CompilerParams(
            # batch axis parallel (2 TCs on v7x), time axis sequential.
            dimension_semantics=("parallel", "arbitrary"),
        ),
    )(f_t, zf_t, r_t, x_p)


# --------------------------------------------------------------------------- #
# Wrapper
# --------------------------------------------------------------------------- #
def sru_layer_forward(x, weight, bias, *, time_block=16):
    """SRU forward.

    x      : (L, B, D) float32 with D == hidden_dim (module's highway view).
    weight : (D, 3*H) float32, PyTorch layout (column 3h+k = gate k, unit h).
    bias   : (2*H,) float32 (forget bias, reset bias).
    Returns (h, c): h is (L, B, H), c is (B, H).
    """
    seq_len, batch, input_dim = x.shape
    hidden_dim = weight.shape[1] // 3
    assert input_dim == hidden_dim, "SRU_Layer forward requires input_dim == hidden_dim"

    # --- parameter plumbing: de-interleave gates -> (3, D, H) = [z, f, r] ---
    w3 = weight.reshape(input_dim, hidden_dim, 3)
    w_stack = jnp.transpose(w3, (2, 0, 1))
    b2 = bias.reshape(2, hidden_dim)

    # --- pad to vreg-friendly shapes (lane=128, sublane=8) ------------------
    h_pad = _round_up(hidden_dim, 128)
    b_pad = _round_up(batch, 8)
    tb = min(time_block, seq_len)
    l_pad = _round_up(seq_len, tb)

    x_p = jnp.pad(x.astype(jnp.float32),
                  ((0, l_pad - seq_len), (0, b_pad - batch), (0, h_pad - input_dim)))
    w_p = jnp.pad(w_stack.astype(jnp.float32),
                  ((0, 0), (0, h_pad - input_dim), (0, h_pad - hidden_dim)))
    b_p = jnp.pad(b2.astype(jnp.float32), ((0, 0), (0, h_pad - hidden_dim)))

    # --- kernel 1: projection + gate activations over all timesteps --------
    # (N tiled at <=256 to keep the weight block modest even on v7x's 64 MiB.)
    n_tile = _largest_divisor_tile(h_pad, 256, 128)
    f_t, zf_t, r_t = _sru_gates(x_p, w_p, b_p, seq_len, tb, n_tile)

    # --- kernel 2: sequential recurrence ------------------------------------
    n_b_blocks = 2 if (b_pad % 16 == 0) else 1          # 2-way for v7x megacore
    batch_tile = b_pad // n_b_blocks
    h_p, c_p = _sru_recurrence(f_t, zf_t, r_t, x_p, tb, batch_tile)

    h = h_p[:seq_len, :batch, :hidden_dim]
    c = c_p[:batch, :hidden_dim]
    # TODO(synk): nn.Dropout is stochastic in training; eval-mode identity here.
    return h, c


# --------------------------------------------------------------------------- #
# Plain-JAX reference (mirrors the PyTorch code path)
# --------------------------------------------------------------------------- #
def _sru_reference(x, weight, bias):
    seq_len, batch, input_dim = x.shape
    hidden_dim = weight.shape[1] // 3
    u = jnp.matmul(x.reshape(-1, input_dim), weight)
    u = u.reshape(seq_len, batch, hidden_dim, 3)
    fb, rb = bias.reshape(2, hidden_dim)
    f_t = jax.nn.sigmoid(u[..., 1] + fb)
    r_t = jax.nn.sigmoid(u[..., 2] + rb)
    x_ = x.reshape(seq_len, batch, hidden_dim)

    def step(c_prev, inputs):
        f, r, z, xt = inputs
        c_t = f * c_prev + (1 - f) * z
        h_t = r * jnp.tanh(c_t) + (1 - r) * xt
        return c_t, h_t

    c_last, h = lax.scan(step, jnp.zeros((batch, hidden_dim), jnp.float32),
                         (f_t, r_t, u[..., 0], x_))
    return h, c_last


# --------------------------------------------------------------------------- #
if __name__ == "__main__":
    seq_len, batch, hidden_dim = 8, 4, 32
    input_dim = hidden_dim  # required by the module's highway view

    key = jax.random.PRNGKey(0)
    kx, kw = jax.random.split(key)

    x = jax.random.normal(kx, (seq_len, batch, input_dim), dtype=jnp.float32)

    dist_max = (2.0 / input_dim) ** 0.5
    weight = jax.random.uniform(kw, (input_dim, 3 * hidden_dim),
                                minval=-dist_max, maxval=dist_max,
                                dtype=jnp.float32)
    bias = jnp.zeros((2 * hidden_dim,), dtype=jnp.float32)

    h, c = jax.jit(sru_layer_forward)(x, weight, bias)
    jax.block_until_ready((h, c))

    h_ref, c_ref = _sru_reference(x, weight, bias)
    assert jnp.allclose(h, h_ref, atol=1e-4, rtol=1e-4), "hidden-state mismatch vs reference"
    assert jnp.allclose(c, c_ref, atol=1e-4, rtol=1e-4), "cell-state mismatch vs reference"

    print("KERNEL_OK")
</pallas_src>

<mosaic_0001>
module attributes {stable_mosaic.version = 11 : i64} {
  func.func @_sru_gates_kernel(%arg0: i32, %arg1: i32, %arg2: memref<8x8x128xf32, #tpu.memory_space<vmem>>, %arg3: memref<3x128x128xf32, #tpu.memory_space<vmem>>, %arg4: memref<2x128xf32, #tpu.memory_space<vmem>>, %arg5: memref<8x8x128xf32, #tpu.memory_space<vmem>>, %arg6: memref<8x8x128xf32, #tpu.memory_space<vmem>>, %arg7: memref<8x8x128xf32, #tpu.memory_space<vmem>>) attributes {dimension_semantics = [#tpu.dimension_semantics<parallel>, #tpu.dimension_semantics<parallel>], iteration_bounds = array<i64: 1, 1>, scalar_prefetch = 0 : i64, scratch_operands = 0 : i64, tpu.core_type = #tpu.core_type<tc>, window_params = [{transform_indices = @transform_0, window_bounds = array<i64: 8, 8, 128>}, {transform_indices = @transform_1, window_bounds = array<i64: 3, 128, 128>}, {transform_indices = @transform_2, window_bounds = array<i64: 2, 128>}, {transform_indices = @transform_3, window_bounds = array<i64: 8, 8, 128>}, {transform_indices = @transform_4, window_bounds = array<i64: 8, 8, 128>}, {transform_indices = @transform_5, window_bounds = array<i64: 8, 8, 128>}]} {
    %c0 = arith.constant 0 : index
    %c0_0 = arith.constant 0 : index
    %c0_1 = arith.constant 0 : index
    %0 = vector.load %arg2[%c0, %c0_0, %c0_1] : memref<8x8x128xf32, #tpu.memory_space<vmem>>, vector<8x8x128xf32>
    %1 = vector.shape_cast %0 : vector<8x8x128xf32> to vector<64x128xf32>
    %c0_2 = arith.constant 0 : index
    %c0_3 = arith.constant 0 : index
    %c0_4 = arith.constant 0 : index
    %2 = vector.load %arg3[%c0_2, %c0_3, %c0_4] : memref<3x128x128xf32, #tpu.memory_space<vmem>>, vector<1x128x128xf32>
    %3 = vector.shape_cast %2 : vector<1x128x128xf32> to vector<128x128xf32>
    %cst = arith.constant dense<0.000000e+00> : vector<64x128xf32>
    %4 = tpu.matmul %1, %3, %cst {dimension_numbers = #tpu.dot_dimension_numbers<[1], [0], [0], [1], [0, 0, 1, 1], [], []>} : vector<64x128xf32>, vector<128x128xf32>, vector<64x128xf32> -> vector<64x128xf32>
    %5 = vector.shape_cast %4 : vector<64x128xf32> to vector<8x8x128xf32>
    %c1 = arith.constant 1 : index
    %c0_5 = arith.constant 0 : index
    %c0_6 = arith.constant 0 : index
    %6 = vector.load %arg3[%c1, %c0_5, %c0_6] : memref<3x128x128xf32, #tpu.memory_space<vmem>>, vector<1x128x128xf32>
    %7 = vector.shape_cast %6 : vector<1x128x128xf32> to vector<128x128xf32>
    %cst_7 = arith.constant dense<0.000000e+00> : vector<64x128xf32>
    %8 = tpu.matmul %1, %7, %cst_7 {dimension_numbers = #tpu.dot_dimension_numbers<[1], [0], [0], [1], [0, 0, 1, 1], [], []>} : vector<64x128xf32>, vector<128x128xf32>, vector<64x128xf32> -> vector<64x128xf32>
    %9 = vector.shape_cast %8 : vector<64x128xf32> to vector<8x8x128xf32>
    %c2 = arith.constant 2 : index
    %c0_8 = arith.constant 0 : index
    %c0_9 = arith.constant 0 : index
    %10 = vector.load %arg3[%c2, %c0_8, %c0_9] : memref<3x128x128xf32, #tpu.memory_space<vmem>>, vector<1x128x128xf32>
    %11 = vector.shape_cast %10 : vector<1x128x128xf32> to vector<128x128xf32>
    %cst_10 = arith.constant dense<0.000000e+00> : vector<64x128xf32>
    %12 = tpu.matmul %1, %11, %cst_10 {dimension_numbers = #tpu.dot_dimension_numbers<[1], [0], [0], [1], [0, 0, 1, 1], [], []>} : vector<64x128xf32>, vector<128x128xf32>, vector<64x128xf32> -> vector<64x128xf32>
    %13 = vector.shape_cast %12 : vector<64x128xf32> to vector<8x8x128xf32>
    %c0_11 = arith.constant 0 : index
    %c0_12 = arith.constant 0 : index
    %14 = vector.load %arg4[%c0_11, %c0_12] : memref<2x128xf32, #tpu.memory_space<vmem>>, vector<1x128xf32>
    %15 = vector.shape_cast %14 : vector<1x128xf32> to vector<1x1x128xf32>
    %16 = vector.broadcast %15 : vector<1x1x128xf32> to vector<8x8x128xf32>
    %17 = arith.addf %9, %16 : vector<8x8x128xf32>
    %18 = arith.negf %17 : vector<8x8x128xf32>
    %19 = math.exp %18 : vector<8x8x128xf32>
    %cst_13 = arith.constant 1.000000e+00 : f32
    %20 = vector.broadcast %cst_13 : f32 to vector<8x8x128xf32>
    %21 = arith.addf %20, %19 : vector<8x8x128xf32>
    %22 = arith.divf %20, %21 : vector<8x8x128xf32>
    %c1_14 = arith.constant 1 : index
    %c0_15 = arith.constant 0 : index
    %23 = vector.load %arg4[%c1_14, %c0_15] : memref<2x128xf32, #tpu.memory_space<vmem>>, vector<1x128xf32>
    %24 = vector.shape_cast %23 : vector<1x128xf32> to vector<1x1x128xf32>
    %25 = vector.broadcast %24 : vector<1x1x128xf32> to vector<8x8x128xf32>
    %26 = arith.addf %13, %25 : vector<8x8x128xf32>
    %27 = arith.negf %26 : vector<8x8x128xf32>
    %28 = math.exp %27 : vector<8x8x128xf32>
    %cst_16 = arith.constant 1.000000e+00 : f32
    %29 = vector.broadcast %cst_16 : f32 to vector<8x8x128xf32>
    %30 = arith.addf %29, %28 : vector<8x8x128xf32>
    %31 = arith.divf %29, %30 : vector<8x8x128xf32>
    %cst_17 = arith.constant 1.000000e+00 : f32
    %32 = vector.broadcast %cst_17 : f32 to vector<8x8x128xf32>
    %33 = arith.subf %32, %22 : vector<8x8x128xf32>
    %34 = arith.mulf %33, %5 : vector<8x8x128xf32>
    %c0_18 = arith.constant 0 : index
    %c0_19 = arith.constant 0 : index
    %c0_20 = arith.constant 0 : index
    %35 = vector.load %arg5[%c0_18, %c0_19, %c0_20] : memref<8x8x128xf32, #tpu.memory_space<vmem>>, vector<8x8x128xf32>
    tpu.vector_store %arg5[%c0_18, %c0_19, %c0_20], %22 {strides = array<i32>} : memref<8x8x128xf32, #tpu.memory_space<vmem>>, vector<8x8x128xf32>,
    %c0_21 = arith.constant 0 : index
    %c0_22 = arith.constant 0 : index
    %c0_23 = arith.constant 0 : index
    %36 = vector.load %arg6[%c0_21, %c0_22, %c0_23] : memref<8x8x128xf32, #tpu.memory_space<vmem>>, vector<8x8x128xf32>
    tpu.vector_store %arg6[%c0_21, %c0_22, %c0_23], %34 {strides = array<i32>} : memref<8x8x128xf32, #tpu.memory_space<vmem>>, vector<8x8x128xf32>,
    %c0_24 = arith.constant 0 : index
    %c0_25 = arith.constant 0 : index
    %c0_26 = arith.constant 0 : index
    %37 = vector.load %arg7[%c0_24, %c0_25, %c0_26] : memref<8x8x128xf32, #tpu.memory_space<vmem>>, vector<8x8x128xf32>
    tpu.vector_store %arg7[%c0_24, %c0_25, %c0_26], %31 {strides = array<i32>} : memref<8x8x128xf32, #tpu.memory_space<vmem>>, vector<8x8x128xf32>,
    return
  }
  func.func @transform_0(%arg0: i32, %arg1: i32) -> (i32, i32, i32) {
    %c0_i32 = arith.constant 0 : i32
    %c0_i32_0 = arith.constant 0 : i32
    %c0_i32_1 = arith.constant 0 : i32
    return %arg1, %c0_i32, %c0_i32_0 : i32, i32, i32
  }
  func.func @transform_1(%arg0: i32, %arg1: i32) -> (i32, i32, i32) {
    %c0_i32 = arith.constant 0 : i32
    %c0_i32_0 = arith.constant 0 : i32
    %c0_i32_1 = arith.constant 0 : i32
    return %c0_i32, %c0_i32_0, %arg0 : i32, i32, i32
  }
  func.func @transform_2(%arg0: i32, %arg1: i32) -> (i32, i32) {
    %c0_i32 = arith.constant 0 : i32
    %c0_i32_0 = arith.constant 0 : i32
    return %c0_i32, %arg0 : i32, i32
  }
  func.func @transform_3(%arg0: i32, %arg1: i32) -> (i32, i32, i32) {
    %c0_i32 = arith.constant 0 : i32
    %c0_i32_0 = arith.constant 0 : i32
    return %arg1, %c0_i32, %arg0 : i32, i32, i32
  }
  func.func @transform_4(%arg0: i32, %arg1: i32) -> (i32, i32, i32) {
    %c0_i32 = arith.constant 0 : i32
    %c0_i32_0 = arith.constant 0 : i32
    return %arg1, %c0_i32, %arg0 : i32, i32, i32
  }
  func.func @transform_5(%arg0: i32, %arg1: i32) -> (i32, i32, i32) {
    %c0_i32 = arith.constant 0 : i32
    %c0_i32_0 = arith.constant 0 : i32
    return %arg1, %c0_i32, %arg0 : i32, i32, i32
  }
}

module attributes {stable_mosaic.version = 11 : i64} {
  func.func @_sru_recurrence_kernel(%arg0: i32, %arg1: i32, %arg2: memref<8x8x128xf32, #tpu.memory_space<vmem>>, %arg3: memref<8x8x128xf32, #tpu.memory_space<vmem>>, %arg4: memref<8x8x128xf32, #tpu.memory_space<vmem>>, %arg5: memref<8x8x128xf32, #tpu.memory_space<vmem>>, %arg6: memref<8x8x128xf32, #tpu.memory_space<vmem>>, %arg7: memref<8x128xf32, #tpu.memory_space<vmem>>) attributes {dimension_semantics = [#tpu.dimension_semantics<parallel>, #tpu.dimension_semantics<arbitrary>], iteration_bounds = array<i64: 1, 1>, scalar_prefetch = 0 : i64, scratch_operands = 0 : i64, tpu.core_type = #tpu.core_type<tc>, window_params = [{transform_indices = @transform_0, window_bounds = array<i64: 8, 8, 128>}, {transform_indices = @transform_1, window_bounds = array<i64: 8, 8, 128>}, {transform_indices = @transform_2, window_bounds = array<i64: 8, 8, 128>}, {transform_indices = @transform_3, window_bounds = array<i64: 8, 8, 128>}, {transform_indices = @transform_4, window_bounds = array<i64: 8, 8, 128>}, {transform_indices = @transform_5, window_bounds = array<i64: 8, 128>}]} {
    %c0_i32 = arith.constant 0 : i32
    %0 = arith.cmpi eq, %arg1, %c0_i32 : i32
    %1 = arith.extui %0 : i1 to i32
    %c0_i32_0 = arith.constant 0 : i32
    %2 = arith.cmpi ne, %1, %c0_i32_0 : i32
    scf.if %2 {
      %cst_92 = arith.constant 0.000000e+00 : f32
      %197 = vector.broadcast %cst_92 : f32 to vector<8x128xf32>
      %c0_93 = arith.constant 0 : index
      %c0_94 = arith.constant 0 : index
      %198 = vector.load %arg7[%c0_93, %c0_94] : memref<8x128xf32, #tpu.memory_space<vmem>>, vector<8x128xf32>
      tpu.vector_store %arg7[%c0_93, %c0_94], %197 {strides = array<i32>} : memref<8x128xf32, #tpu.memory_space<vmem>>, vector<8x128xf32>,
    } else {
    }
    %c0 = arith.constant 0 : index
    %c0_1 = arith.constant 0 : index
    %3 = vector.load %arg7[%c0, %c0_1] : memref<8x128xf32, #tpu.memory_space<vmem>>, vector<8x128xf32>
    %c0_i32_2 = arith.constant 0 : i32
    %4 = arith.index_cast %c0_i32_2 : i32 to index
    %c0_3 = arith.constant 0 : index
    %c0_4 = arith.constant 0 : index
    %5 = vector.load %arg2[%4, %c0_3, %c0_4] : memref<8x8x128xf32, #tpu.memory_space<vmem>>, vector<1x8x128xf32>
    %6 = vector.shape_cast %5 : vector<1x8x128xf32> to vector<8x128xf32>
    %7 = arith.mulf %6, %3 : vector<8x128xf32>
    %8 = arith.index_cast %c0_i32_2 : i32 to index
    %c0_5 = arith.constant 0 : index
    %c0_6 = arith.constant 0 : index
    %9 = vector.load %arg3[%8, %c0_5, %c0_6] : memref<8x8x128xf32, #tpu.memory_space<vmem>>, vector<1x8x128xf32>
    %10 = vector.shape_cast %9 : vector<1x8x128xf32> to vector<8x128xf32>
    %11 = arith.addf %7, %10 : vector<8x128xf32>
    %12 = arith.index_cast %c0_i32_2 : i32 to index
    %c0_7 = arith.constant 0 : index
    %c0_8 = arith.constant 0 : index
    %13 = vector.load %arg4[%12, %c0_7, %c0_8] : memref<8x8x128xf32, #tpu.memory_space<vmem>>, vector<1x8x128xf32>
    %14 = vector.shape_cast %13 : vector<1x8x128xf32> to vector<8x128xf32>
    %15 = math.tanh %11 : vector<8x128xf32>
    %16 = arith.mulf %14, %15 : vector<8x128xf32>
    %cst = arith.constant 1.000000e+00 : f32
    %17 = vector.broadcast %cst : f32 to vector<8x128xf32>
    %18 = arith.subf %17, %14 : vector<8x128xf32>
    %19 = arith.index_cast %c0_i32_2 : i32 to index
    %c0_9 = arith.constant 0 : index
    %c0_10 = arith.constant 0 : index
    %20 = vector.load %arg5[%19, %c0_9, %c0_10] : memref<8x8x128xf32, #tpu.memory_space<vmem>>, vector<1x8x128xf32>
    %21 = vector.shape_cast %20 : vector<1x8x128xf32> to vector<8x128xf32>
    %22 = arith.mulf %18, %21 : vector<8x128xf32>
    %23 = arith.addf %16, %22 : vector<8x128xf32>
    %24 = arith.index_cast %c0_i32_2 : i32 to index
    %c0_11 = arith.constant 0 : index
    %c0_12 = arith.constant 0 : index
    %25 = vector.load %arg6[%24, %c0_11, %c0_12] : memref<8x8x128xf32, #tpu.memory_space<vmem>>, vector<1x8x128xf32>
    %26 = vector.shape_cast %25 : vector<1x8x128xf32> to vector<8x128xf32>
    %27 = vector.shape_cast %23 : vector<8x128xf32> to vector<1x8x128xf32>
    tpu.vector_store %arg6[%24, %c0_11, %c0_12], %27 {strides = array<i32>} : memref<8x8x128xf32, #tpu.memory_space<vmem>>, vector<1x8x128xf32>,
    %c1_i32 = arith.constant 1 : i32
    %28 = arith.index_cast %c1_i32 : i32 to index
    %c0_13 = arith.constant 0 : index
    %c0_14 = arith.constant 0 : index
    %29 = vector.load %arg2[%28, %c0_13, %c0_14] : memref<8x8x128xf32, #tpu.memory_space<vmem>>, vector<1x8x128xf32>
    %30 = vector.shape_cast %29 : vector<1x8x128xf32> to vector<8x128xf32>
    %31 = arith.mulf %30, %11 : vector<8x128xf32>
    %32 = arith.index_cast %c1_i32 : i32 to index
    %c0_15 = arith.constant 0 : index
    %c0_16 = arith.constant 0 : index
    %33 = vector.load %arg3[%32, %c0_15, %c0_16] : memref<8x8x128xf32, #tpu.memory_space<vmem>>, vector<1x8x128xf32>
    %34 = vector.shape_cast %33 : vector<1x8x128xf32> to vector<8x128xf32>
    %35 = arith.addf %31, %34 : vector<8x128xf32>
    %36 = arith.index_cast %c1_i32 : i32 to index
    %c0_17 = arith.constant 0 : index
    %c0_18 = arith.constant 0 : index
    %37 = vector.load %arg4[%36, %c0_17, %c0_18] : memref<8x8x128xf32, #tpu.memory_space<vmem>>, vector<1x8x128xf32>
    %38 = vector.shape_cast %37 : vector<1x8x128xf32> to vector<8x128xf32>
    %39 = math.tanh %35 : vector<8x128xf32>
    %40 = arith.mulf %38, %39 : vector<8x128xf32>
    %cst_19 = arith.constant 1.000000e+00 : f32
    %41 = vector.broadcast %cst_19 : f32 to vector<8x128xf32>
    %42 = arith.subf %41, %38 : vector<8x128xf32>
    %43 = arith.index_cast %c1_i32 : i32 to index
    %c0_20 = arith.constant 0 : index
    %c0_21 = arith.constant 0 : index
    %44 = vector.load %arg5[%43, %c0_20, %c0_21] : memref<8x8x128xf32, #tpu.memory_space<vmem>>, vector<1x8x128xf32>
    %45 = vector.shape_cast %44 : vector<1x8x128xf32> to vector<8x128xf32>
    %46 = arith.mulf %42, %45 : vector<8x128xf32>
    %47 = arith.addf %40, %46 : vector<8x128xf32>
    %48 = arith.index_cast %c1_i32 : i32 to index
    %c0_22 = arith.constant 0 : index
    %c0_23 = arith.constant 0 : index
    %49 = vector.load %arg6[%48, %c0_22, %c0_23] : memref<8x8x128xf32, #tpu.memory_space<vmem>>, vector<1x8x128xf32>
    %50 = vector.shape_cast %49 : vector<1x8x128xf32> to vector<8x128xf32>
    %51 = vector.shape_cast %47 : vector<8x128xf32> to vector<1x8x128xf32>
    tpu.vector_store %arg6[%48, %c0_22, %c0_23], %51 {strides = array<i32>} : memref<8x8x128xf32, #tpu.memory_space<vmem>>, vector<1x8x128xf32>,
    %c2_i32 = arith.constant 2 : i32
    %52 = arith.index_cast %c2_i32 : i32 to index
    %c0_24 = arith.constant 0 : index
    %c0_25 = arith.constant 0 : index
    %53 = vector.load %arg2[%52, %c0_24, %c0_25] : memref<8x8x128xf32, #tpu.memory_space<vmem>>, vector<1x8x128xf32>
    %54 = vector.shape_cast %53 : vector<1x8x128xf32> to vector<8x128xf32>
    %55 = arith.mulf %54, %35 : vector<8x128xf32>
    %56 = arith.index_cast %c2_i32 : i32 to index
    %c0_26 = arith.constant 0 : index
    %c0_27 = arith.constant 0 : index
    %57 = vector.load %arg3[%56, %c0_26, %c0_27] : memref<8x8x128xf32, #tpu.memory_space<vmem>>, vector<1x8x128xf32>
    %58 = vector.shape_cast %57 : vector<1x8x128xf32> to vector<8x128xf32>
    %59 = arith.addf %55, %58 : vector<8x128xf32>
    %60 = arith.index_cast %c2_i32 : i32 to index
    %c0_28 = arith.constant 0 : index
    %c0_29 = arith.constant 0 : index
    %61 = vector.load %arg4[%60, %c0_28, %c0_29] : memref<8x8x128xf32, #tpu.memory_space<vmem>>, vector<1x8x128xf32>
    %62 = vector.shape_cast %61 : vector<1x8x128xf32> to vector<8x128xf32>
    %63 = math.tanh %59 : vector<8x128xf32>
    %64 = arith.mulf %62, %63 : vector<8x128xf32>
    %cst_30 = arith.constant 1.000000e+00 : f32
    %65 = vector.broadcast %cst_30 : f32 to vector<8x128xf32>
    %66 = arith.subf %65, %62 : vector<8x128xf32>
    %67 = arith.index_cast %c2_i32 : i32 to index
    %c0_31 = arith.constant 0 : index
    %c0_32 = arith.constant 0 : index
    %68 = vector.load %arg5[%67, %c0_31, %c0_32] : memref<8x8x128xf32, #tpu.memory_space<vmem>>, vector<1x8x128xf32>
    %69 = vector.shape_cast %68 : vector<1x8x128xf32> to vector<8x128xf32>
    %70 = arith.mulf %66, %69 : vector<8x128xf32>
    %71 = arith.addf %64, %70 : vector<8x128xf32>
    %72 = arith.index_cast %c2_i32 : i32 to index
    %c0_33 = arith.constant 0 : index
    %c0_34 = arith.constant 0 : index
    %73 = vector.load %arg6[%72, %c0_33, %c0_34] : memref<8x8x128xf32, #tpu.memory_space<vmem>>, vector<1x8x128xf32>
    %74 = vector.shape_cast %73 : vector<1x8x128xf32> to vector<8x128xf32>
    %75 = vector.shape_cast %71 : vector<8x128xf32> to vector<1x8x128xf32>
    tpu.vector_store %arg6[%72, %c0_33, %c0_34], %75 {strides = array<i32>} : memref<8x8x128xf32, #tpu.memory_space<vmem>>, vector<1x8x128xf32>,
    %c3_i32 = arith.constant 3 : i32
    %76 = arith.index_cast %c3_i32 : i32 to index
    %c0_35 = arith.constant 0 : index
    %c0_36 = arith.constant 0 : index
    %77 = vector.load %arg2[%76, %c0_35, %c0_36] : memref<8x8x128xf32, #tpu.memory_space<vmem>>, vector<1x8x128xf32>
    %78 = vector.shape_cast %77 : vector<1x8x128xf32> to vector<8x128xf32>
    %79 = arith.mulf %78, %59 : vector<8x128xf32>
    %80 = arith.index_cast %c3_i32 : i32 to index
    %c0_37 = arith.constant 0 : index
    %c0_38 = arith.constant 0 : index
    %81 = vector.load %arg3[%80, %c0_37, %c0_38] : memref<8x8x128xf32, #tpu.memory_space<vmem>>, vector<1x8x128xf32>
    %82 = vector.shape_cast %81 : vector<1x8x128xf32> to vector<8x128xf32>
    %83 = arith.addf %79, %82 : vector<8x128xf32>
    %84 = arith.index_cast %c3_i32 : i32 to index
    %c0_39 = arith.constant 0 : index
    %c0_40 = arith.constant 0 : index
    %85 = vector.load %arg4[%84, %c0_39, %c0_40] : memref<8x8x128xf32, #tpu.memory_space<vmem>>, vector<1x8x128xf32>
    %86 = vector.shape_cast %85 : vector<1x8x128xf32> to vector<8x128xf32>
    %87 = math.tanh %83 : vector<8x128xf32>
    %88 = arith.mulf %86, %87 : vector<8x128xf32>
    %cst_41 = arith.constant 1.000000e+00 : f32
    %89 = vector.broadcast %cst_41 : f32 to vector<8x128xf32>
    %90 = arith.subf %89, %86 : vector<8x128xf32>
    %91 = arith.index_cast %c3_i32 : i32 to index
    %c0_42 = arith.constant 0 : index
    %c0_43 = arith.constant 0 : index
    %92 = vector.load %arg5[%91, %c0_42, %c0_43] : memref<8x8x128xf32, #tpu.memory_space<vmem>>, vector<1x8x128xf32>
    %93 = vector.shape_cast %92 : vector<1x8x128xf32> to vector<8x128xf32>
    %94 = arith.mulf %90, %93 : vector<8x128xf32>
    %95 = arith.addf %88, %94 : vector<8x128xf32>
    %96 = arith.index_cast %c3_i32 : i32 to index
    %c0_44 = arith.constant 0 : index
    %c0_45 = arith.constant 0 : index
    %97 = vector.load %arg6[%96, %c0_44, %c0_45] : memref<8x8x128xf32, #tpu.memory_space<vmem>>, vector<1x8x128xf32>
    %98 = vector.shape_cast %97 : vector<1x8x128xf32> to vector<8x128xf32>
    %99 = vector.shape_cast %95 : vector<8x128xf32> to vector<1x8x128xf32>
    tpu.vector_store %arg6[%96, %c0_44, %c0_45], %99 {strides = array<i32>} : memref<8x8x128xf32, #tpu.memory_space<vmem>>, vector<1x8x128xf32>,
    %c4_i32 = arith.constant 4 : i32
    %100 = arith.index_cast %c4_i32 : i32 to index
    %c0_46 = arith.constant 0 : index
    %c0_47 = arith.constant 0 : index
    %101 = vector.load %arg2[%100, %c0_46, %c0_47] : memref<8x8x128xf32, #tpu.memory_space<vmem>>, vector<1x8x128xf32>
    %102 = vector.shape_cast %101 : vector<1x8x128xf32> to vector<8x128xf32>
    %103 = arith.mulf %102, %83 : vector<8x128xf32>
    %104 = arith.index_cast %c4_i32 : i32 to index
    %c0_48 = arith.constant 0 : index
    %c0_49 = arith.constant 0 : index
    %105 = vector.load %arg3[%104, %c0_48, %c0_49] : memref<8x8x128xf32, #tpu.memory_space<vmem>>, vector<1x8x128xf32>
    %106 = vector.shape_cast %105 : vector<1x8x128xf32> to vector<8x128xf32>
    %107 = arith.addf %103, %106 : vector<8x128xf32>
    %108 = arith.index_cast %c4_i32 : i32 to index
    %c0_50 = arith.constant 0 : index
    %c0_51 = arith.constant 0 : index
    %109 = vector.load %arg4[%108, %c0_50, %c0_51] : memref<8x8x128xf32, #tpu.memory_space<vmem>>, vector<1x8x128xf32>
    %110 = vector.shape_cast %109 : vector<1x8x128xf32> to vector<8x128xf32>
    %111 = math.tanh %107 : vector<8x128xf32>
    %112 = arith.mulf %110, %111 : vector<8x128xf32>
    %cst_52 = arith.constant 1.000000e+00 : f32
    %113 = vector.broadcast %cst_52 : f32 to vector<8x128xf32>
    %114 = arith.subf %113, %110 : vector<8x128xf32>
    %115 = arith.index_cast %c4_i32 : i32 to index
    %c0_53 = arith.constant 0 : index
    %c0_54 = arith.constant 0 : index
    %116 = vector.load %arg5[%115, %c0_53, %c0_54] : memref<8x8x128xf32, #tpu.memory_space<vmem>>, vector<1x8x128xf32>
    %117 = vector.shape_cast %116 : vector<1x8x128xf32> to vector<8x128xf32>
    %118 = arith.mulf %114, %117 : vector<8x128xf32>
    %119 = arith.addf %112, %118 : vector<8x128xf32>
    %120 = arith.index_cast %c4_i32 : i32 to index
    %c0_55 = arith.constant 0 : index
    %c0_56 = arith.constant 0 : index
    %121 = vector.load %arg6[%120, %c0_55, %c0_56] : memref<8x8x128xf32, #tpu.memory_space<vmem>>, vector<1x8x128xf32>
    %122 = vector.shape_cast %121 : vector<1x8x128xf32> to vector<8x128xf32>
    %123 = vector.shape_cast %119 : vector<8x128xf32> to vector<1x8x128xf32>
    tpu.vector_store %arg6[%120, %c0_55, %c0_56], %123 {strides = array<i32>} : memref<8x8x128xf32, #tpu.memory_space<vmem>>, vector<1x8x128xf32>,
    %c5_i32 = arith.constant 5 : i32
    %124 = arith.index_cast %c5_i32 : i32 to index
    %c0_57 = arith.constant 0 : index
    %c0_58 = arith.constant 0 : index
    %125 = vector.load %arg2[%124, %c0_57, %c0_58] : memref<8x8x128xf32, #tpu.memory_space<vmem>>, vector<1x8x128xf32>
    %126 = vector.shape_cast %125 : vector<1x8x128xf32> to vector<8x128xf32>
    %127 = arith.mulf %126, %107 : vector<8x128xf32>
    %128 = arith.index_cast %c5_i32 : i32 to index
    %c0_59 = arith.constant 0 : index
    %c0_60 = arith.constant 0 : index
    %129 = vector.load %arg3[%128, %c0_59, %c0_60] : memref<8x8x128xf32, #tpu.memory_space<vmem>>, vector<1x8x128xf32>
    %130 = vector.shape_cast %129 : vector<1x8x128xf32> to vector<8x128xf32>
    %131 = arith.addf %127, %130 : vector<8x128xf32>
    %132 = arith.index_cast %c5_i32 : i32 to index
    %c0_61 = arith.constant 0 : index
    %c0_62 = arith.constant 0 : index
    %133 = vector.load %arg4[%132, %c0_61, %c0_62] : memref<8x8x128xf32, #tpu.memory_space<vmem>>, vector<1x8x128xf32>
    %134 = vector.shape_cast %133 : vector<1x8x128xf32> to vector<8x128xf32>
    %135 = math.tanh %131 : vector<8x128xf32>
    %136 = arith.mulf %134, %135 : vector<8x128xf32>
    %cst_63 = arith.constant 1.000000e+00 : f32
    %137 = vector.broadcast %cst_63 : f32 to vector<8x128xf32>
    %138 = arith.subf %137, %134 : vector<8x128xf32>
    %139 = arith.index_cast %c5_i32 : i32 to index
    %c0_64 = arith.constant 0 : index
    %c0_65 = arith.constant 0 : index
    %140 = vector.load %arg5[%139, %c0_64, %c0_65] : memref<8x8x128xf32, #tpu.memory_space<vmem>>, vector<1x8x128xf32>
    %141 = vector.shape_cast %140 : vector<1x8x128xf32> to vector<8x128xf32>
    %142 = arith.mulf %138, %141 : vector<8x128xf32>
    %143 = arith.addf %136, %142 : vector<8x128xf32>
    %144 = arith.index_cast %c5_i32 : i32 to index
    %c0_66 = arith.constant 0 : index
    %c0_67 = arith.constant 0 : index
    %145 = vector.load %arg6[%144, %c0_66, %c0_67] : memref<8x8x128xf32, #tpu.memory_space<vmem>>, vector<1x8x128xf32>
    %146 = vector.shape_cast %145 : vector<1x8x128xf32> to vector<8x128xf32>
    %147 = vector.shape_cast %143 : vector<8x128xf32> to vector<1x8x128xf32>
    tpu.vector_store %arg6[%144, %c0_66, %c0_67], %147 {strides = array<i32>} : memref<8x8x128xf32, #tpu.memory_space<vmem>>, vector<1x8x128xf32>,
    %c6_i32 = arith.constant 6 : i32
    %148 = arith.index_cast %c6_i32 : i32 to index
    %c0_68 = arith.constant 0 : index
    %c0_69 = arith.constant 0 : index
    %149 = vector.load %arg2[%148, %c0_68, %c0_69] : memref<8x8x128xf32, #tpu.memory_space<vmem>>, vector<1x8x128xf32>
    %150 = vector.shape_cast %149 : vector<1x8x128xf32> to vector<8x128xf32>
    %151 = arith.mulf %150, %131 : vector<8x128xf32>
    %152 = arith.index_cast %c6_i32 : i32 to index
    %c0_70 = arith.constant 0 : index
    %c0_71 = arith.constant 0 : index
    %153 = vector.load %arg3[%152, %c0_70, %c0_71] : memref<8x8x128xf32, #tpu.memory_space<vmem>>, vector<1x8x128xf32>
    %154 = vector.shape_cast %153 : vector<1x8x128xf32> to vector<8x128xf32>
    %155 = arith.addf %151, %154 : vector<8x128xf32>
    %156 = arith.index_cast %c6_i32 : i32 to index
    %c0_72 = arith.constant 0 : index
    %c0_73 = arith.constant 0 : index
    %157 = vector.load %arg4[%156, %c0_72, %c0_73] : memref<8x8x128xf32, #tpu.memory_space<vmem>>, vector<1x8x128xf32>
    %158 = vector.shape_cast %157 : vector<1x8x128xf32> to vector<8x128xf32>
    %159 = math.tanh %155 : vector<8x128xf32>
    %160 = arith.mulf %158, %159 : vector<8x128xf32>
    %cst_74 = arith.constant 1.000000e+00 : f32
    %161 = vector.broadcast %cst_74 : f32 to vector<8x128xf32>
    %162 = arith.subf %161, %158 : vector<8x128xf32>
    %163 = arith.index_cast %c6_i32 : i32 to index
    %c0_75 = arith.constant 0 : index
    %c0_76 = arith.constant 0 : index
    %164 = vector.load %arg5[%163, %c0_75, %c0_76] : memref<8x8x128xf32, #tpu.memory_space<vmem>>, vector<1x8x128xf32>
    %165 = vector.shape_cast %164 : vector<1x8x128xf32> to vector<8x128xf32>
    %166 = arith.mulf %162, %165 : vector<8x128xf32>
    %167 = arith.addf %160, %166 : vector<8x128xf32>
    %168 = arith.index_cast %c6_i32 : i32 to index
    %c0_77 = arith.constant 0 : index
    %c0_78 = arith.constant 0 : index
    %169 = vector.load %arg6[%168, %c0_77, %c0_78] : memref<8x8x128xf32, #tpu.memory_space<vmem>>, vector<1x8x128xf32>
    %170 = vector.shape_cast %169 : vector<1x8x128xf32> to vector<8x128xf32>
    %171 = vector.shape_cast %167 : vector<8x128xf32> to vector<1x8x128xf32>
    tpu.vector_store %arg6[%168, %c0_77, %c0_78], %171 {strides = array<i32>} : memref<8x8x128xf32, #tpu.memory_space<vmem>>, vector<1x8x128xf32>,
    %c7_i32 = arith.constant 7 : i32
    %172 = arith.index_cast %c7_i32 : i32 to index
    %c0_79 = arith.constant 0 : index
    %c0_80 = arith.constant 0 : index
    %173 = vector.load %arg2[%172, %c0_79, %c0_80] : memref<8x8x128xf32, #tpu.memory_space<vmem>>, vector<1x8x128xf32>
    %174 = vector.shape_cast %173 : vector<1x8x128xf32> to vector<8x128xf32>
    %175 = arith.mulf %174, %155 : vector<8x128xf32>
    %176 = arith.index_cast %c7_i32 : i32 to index
    %c0_81 = arith.constant 0 : index
    %c0_82 = arith.constant 0 : index
    %177 = vector.load %arg3[%176, %c0_81, %c0_82] : memref<8x8x128xf32, #tpu.memory_space<vmem>>, vector<1x8x128xf32>
    %178 = vector.shape_cast %177 : vector<1x8x128xf32> to vector<8x128xf32>
    %179 = arith.addf %175, %178 : vector<8x128xf32>
    %180 = arith.index_cast %c7_i32 : i32 to index
    %c0_83 = arith.constant 0 : index
    %c0_84 = arith.constant 0 : index
    %181 = vector.load %arg4[%180, %c0_83, %c0_84] : memref<8x8x128xf32, #tpu.memory_space<vmem>>, vector<1x8x128xf32>
    %182 = vector.shape_cast %181 : vector<1x8x128xf32> to vector<8x128xf32>
    %183 = math.tanh %179 : vector<8x128xf32>
    %184 = arith.mulf %182, %183 : vector<8x128xf32>
    %cst_85 = arith.constant 1.000000e+00 : f32
    %185 = vector.broadcast %cst_85 : f32 to vector<8x128xf32>
    %186 = arith.subf %185, %182 : vector<8x128xf32>
    %187 = arith.index_cast %c7_i32 : i32 to index
    %c0_86 = arith.constant 0 : index
    %c0_87 = arith.constant 0 : index
    %188 = vector.load %arg5[%187, %c0_86, %c0_87] : memref<8x8x128xf32, #tpu.memory_space<vmem>>, vector<1x8x128xf32>
    %189 = vector.shape_cast %188 : vector<1x8x128xf32> to vector<8x128xf32>
    %190 = arith.mulf %186, %189 : vector<8x128xf32>
    %191 = arith.addf %184, %190 : vector<8x128xf32>
    %192 = arith.index_cast %c7_i32 : i32 to index
    %c0_88 = arith.constant 0 : index
    %c0_89 = arith.constant 0 : index
    %193 = vector.load %arg6[%192, %c0_88, %c0_89] : memref<8x8x128xf32, #tpu.memory_space<vmem>>, vector<1x8x128xf32>
    %194 = vector.shape_cast %193 : vector<1x8x128xf32> to vector<8x128xf32>
    %195 = vector.shape_cast %191 : vector<8x128xf32> to vector<1x8x128xf32>
    tpu.vector_store %arg6[%192, %c0_88, %c0_89], %195 {strides = array<i32>} : memref<8x8x128xf32, #tpu.memory_space<vmem>>, vector<1x8x128xf32>,
    %c8_i32 = arith.constant 8 : i32
    %c0_90 = arith.constant 0 : index
    %c0_91 = arith.constant 0 : index
    %196 = vector.load %arg7[%c0_90, %c0_91] : memref<8x128xf32, #tpu.memory_space<vmem>>, vector<8x128xf32>
    tpu.vector_store %arg7[%c0_90, %c0_91], %179 {strides = array<i32>} : memref<8x128xf32, #tpu.memory_space<vmem>>, vector<8x128xf32>,
    return
  }
  func.func @transform_0(%arg0: i32, %arg1: i32) -> (i32, i32, i32) {
    %c0_i32 = arith.constant 0 : i32
    %c0_i32_0 = arith.constant 0 : i32
    return %arg1, %arg0, %c0_i32 : i32, i32, i32
  }
  func.func @transform_1(%arg0: i32, %arg1: i32) -> (i32, i32, i32) {
    %c0_i32 = arith.constant 0 : i32
    %c0_i32_0 = arith.constant 0 : i32
    return %arg1, %arg0, %c0_i32 : i32, i32, i32
  }
  func.func @transform_2(%arg0: i32, %arg1: i32) -> (i32, i32, i32) {
    %c0_i32 = arith.constant 0 : i32
    %c0_i32_0 = arith.constant 0 : i32
    return %arg1, %arg0, %c0_i32 : i32, i32, i32
  }
  func.func @transform_3(%arg0: i32, %arg1: i32) -> (i32, i32, i32) {
    %c0_i32 = arith.constant 0 : i32
    %c0_i32_0 = arith.constant 0 : i32
    return %arg1, %arg0, %c0_i32 : i32, i32, i32
  }
  func.func @transform_4(%arg0: i32, %arg1: i32) -> (i32, i32, i32) {
    %c0_i32 = arith.constant 0 : i32
    %c0_i32_0 = arith.constant 0 : i32
    return %arg1, %arg0, %c0_i32 : i32, i32, i32
  }
  func.func @transform_5(%arg0: i32, %arg1: i32) -> (i32, i32) {
    %c0_i32 = arith.constant 0 : i32
    %c0_i32_0 = arith.constant 0 : i32
    return %arg0, %c0_i32 : i32, i32
  }
}

</mosaic_0001>

<llo_original>
// kernel: sru_layer_forward.2
$region0: #{sru_layer_forward.2}
  #allocation0 [shape = 'u32[]', space=smem, size = 0x4, offset = 0x4, fixed_abs, tag = 'smem constant byte address 0x4 - core index']
  #allocation1 [shape = 'u32[144,128]{1,0:T(1,128)}', space=vmem, size = 0x12000, scoped, tag = 'internal scratch']
  %s0 = inlined_call_operand.vmem [shape: f32[8,8,128], index: 0, kind: input, shape index: {}]
  %s1 = inlined_call_operand.vmem [shape: f32[3,128,128], index: 1, kind: input, shape index: {}]
  %s2 = inlined_call_operand.vmem [shape: f32[2,128], index: 2, kind: input, shape index: {}]
  %s3 = inlined_call_operand.vmem [shape: f32[8,8,128], index: 3, kind: output, shape index: {0}]
  %s4 = inlined_call_operand.vmem [shape: f32[8,8,128], index: 4, kind: output, shape index: {1}]
  %s5 = inlined_call_operand.vmem [shape: f32[8,8,128], index: 5, kind: output, shape index: {2}]
  %6 = xla_tuple %s3, %s4, %s5
  %s7 = sld [smem:[#allocation0]]
  $region38: #{sru_layer_forward.2} parent=0
    _
  %s9 = ssub.s32 1, %s7
  %s10 = scalar_select 0, %s9, %s7
  // Predicated region
  $region2: #{sru_layer_forward.2} parent=0 // pred_check
    _
  $region3: #{sru_layer_forward.2} parent=0 // pred_check_branch
    %12 = sbr.rel (0) target = $region5
  $region4: #{sru_layer_forward.2} parent=0 // pred_region
    _
  $region5: #{sru_layer_forward.2} parent=0 // pred_fallthru
    _
  // Predicated region
  $region6: #{sru_layer_forward.2} parent=0 // pred_check
    _
  $region7: #{sru_layer_forward.2} parent=0 // pred_check_branch
    %14 = sbr.rel (0) target = $region9
  $region8: #{sru_layer_forward.2} parent=0 // pred_region
    _
  $region9: #{sru_layer_forward.2} parent=0 // pred_fallthru
    _
  // Predicated region
  $region10: #{sru_layer_forward.2} parent=0 // pred_check
    _
  $region11: #{sru_layer_forward.2} parent=0 // pred_check_branch
    %16 = sbr.rel (0) target = $region13
  $region12: #{sru_layer_forward.2} parent=0 // pred_region
    _
  $region13: #{sru_layer_forward.2} parent=0 // pred_fallthru
    _
  %v17 = vld [vmem:[%s0] sm:$0xff]
  %v18 = vld [vmem:[%s0 + $0x8] sm:$0xff]
  %v19 = vld [vmem:[%s0 + $0x10] sm:$0xff]
  %v20 = vld [vmem:[%s0 + $0x18] sm:$0xff]
  %v21 = vld [vmem:[%s0 + $0x20] sm:$0xff]
  %v22 = vld [vmem:[%s0 + $0x28] sm:$0xff]
  %v23 = vld [vmem:[%s0 + $0x30] sm:$0xff]
  %v24 = vld [vmem:[%s0 + $0x38] sm:$0xff]
  %v25 = vld [vmem:[%s1] sm:$0xff]
  %v26 = vld [vmem:[%s1 + $0x8] sm:$0xff]
  %v27 = vld [vmem:[%s1 + $0x10] sm:$0xff]
  %v28 = vld [vmem:[%s1 + $0x18] sm:$0xff]
  %v29 = vld [vmem:[%s1 + $0x20] sm:$0xff]
  %v30 = vld [vmem:[%s1 + $0x28] sm:$0xff]
  %v31 = vld [vmem:[%s1 + $0x30] sm:$0xff]
  %v32 = vld [vmem:[%s1 + $0x38] sm:$0xff]
  %v33 = vld [vmem:[%s1 + $0x40] sm:$0xff]
  %v34 = vld [vmem:[%s1 + $0x48] sm:$0xff]
  %v35 = vld [vmem:[%s1 + $0x50] sm:$0xff]
  %v36 = vld [vmem:[%s1 + $0x58] sm:$0xff]
  %v37 = vld [vmem:[%s1 + $0x60] sm:$0xff]
  %v38 = vld [vmem:[%s1 + $0x68] sm:$0xff]
  %v39 = vld [vmem:[%s1 + $0x70] sm:$0xff]
  %v40 = vld [vmem:[%s1 + $0x78] sm:$0xff]
  %41 = vmatprep.subr.mxu0 0.0
  %42 = vmatpush1.msra.mxu0 %v25
  %43 = vmatprep.subr.mxu0 0.0
  %44 = vmatpush1.msra.mxu0 %v26
  %45 = vmatprep.subr.mxu0 0.0
  %46 = vmatpush1.msra.mxu0 %v27
  %47 = vmatprep.subr.mxu0 0.0
  %48 = vmatpush1.msra.mxu0 %v28
  %49 = vmatprep.subr.mxu0 0.0
  %50 = vmatpush1.msra.mxu0 %v29
  %51 = vmatprep.subr.mxu0 0.0
  %52 = vmatpush1.msra.mxu0 %v30
  %53 = vmatprep.subr.mxu0 0.0
  %54 = vmatpush1.msra.mxu0 %v31
  %55 = vmatprep.subr.mxu0 0.0
  %56 = vmatpush1.msra.mxu0 %v32
  %57 = vmatprep.subr.mxu0 0.0
  %58 = vmatpush1.msra.mxu0 %v33
  %59 = vmatprep.subr.mxu0 0.0
  %60 = vmatpush1.msra.mxu0 %v34
  %61 = vmatprep.subr.mxu0 0.0
  %62 = vmatpush1.msra.mxu0 %v35
  %63 = vmatprep.subr.mxu0 0.0
  %64 = vmatpush1.msra.mxu0 %v36
  %65 = vmatprep.subr.mxu0 0.0
  %66 = vmatpush1.msra.mxu0 %v37
  %67 = vmatprep.subr.mxu0 0.0
  %68 = vmatpush1.msra.mxu0 %v38
  %69 = vmatprep.subr.mxu0 0.0
  %70 = vmatpush1.msra.mxu0 %v39
  %71 = vmatprep.subr.mxu0 0.0
  %72 = vmatpush1.msra.mxu0 %v40
  %73 = vmatprep.subr.mxu0 0.0
  %74 = vmatpush1.msra.mxu0 0.0
  %75 = vmatprep.subr.mxu0 0.0
  %76 = vmatpush1.msra.mxu0 0.0
  %77 = vmatprep.subr.mxu0 0.0
  %78 = vmatpush1.msra.mxu0 0.0
  %79 = vmatprep.subr.mxu0 0.0
  %80 = vmatpush1.msra.mxu0 0.0
  %81 = vmatprep.subr.mxu0 0.0
  %82 = vmatpush1.msra.mxu0 0.0
  %83 = vmatprep.subr.mxu0 0.0
  %84 = vmatpush1.msra.mxu0 0.0
  %85 = vmatprep.subr.mxu0 0.0
  %86 = vmatpush1.msra.mxu0 0.0
  %87 = vmatprep.subr.mxu0 0.0
  %88 = vmatpush1.msra.mxu0 0.0
  %89 = vmatprep.subr.mxu0 0.0
  %90 = vmatpush1.msra.mxu0 0.0
  %91 = vmatprep.subr.mxu0 0.0
  %92 = vmatpush1.msra.mxu0 0.0
  %93 = vmatprep.subr.mxu0 0.0
  %94 = vmatpush1.msra.mxu0 0.0
  %95 = vmatprep.subr.mxu0 0.0
  %96 = vmatpush1.msra.mxu0 0.0
  %97 = vmatprep.subr.mxu0 0.0
  %98 = vmatpush1.msra.mxu0 0.0
  %99 = vmatprep.subr.mxu0 0.0
  %100 = vmatpush1.msra.mxu0 0.0
  %101 = vmatprep.subr.mxu0 0.0
  %102 = vmatpush1.msra.mxu0 0.0
  %103 = vmatprep.subr.mxu0 0.0
  %104 = vmatpush1.msra.mxu0 0.0
  %105 = vmatprep.mubr.f32.mxu0 0.0
  %106 = vmatmul.mubr.f32.gmra.mrb[0].mxu0 %v17
  %v107 = vpop.f32.mrb[0].mxu0
  %v108 = vadd.f32 0.0, %v107
  %v109 = vpop.f32.mrb[0].mxu0
  %110 = vmatprep.mubr.f32.mxu0 0.0
  %111 = vmatmul.mubr.f32.gmra.mrb[0].mxu0 %v18
  %v112 = vpop.f32.mrb[0].mxu0
  %v113 = vadd.f32 0.0, %v112
  %v114 = vpop.f32.mrb[0].mxu0
  %115 = vmatprep.mubr.f32.mxu0 0.0
  %116 = vmatmul.mubr.f32.gmra.mrb[0].mxu0 %v19
  %v117 = vpop.f32.mrb[0].mxu0
  %v118 = vadd.f32 0.0, %v117
  %v119 = vpop.f32.mrb[0].mxu0
  %120 = vmatprep.mubr.f32.mxu0 0.0
  %121 = vmatmul.mubr.f32.gmra.mrb[0].mxu0 %v20
  %v122 = vpop.f32.mrb[0].mxu0
  %v123 = vadd.f32 0.0, %v122
  %v124 = vpop.f32.mrb[0].mxu0
  %125 = vmatprep.mubr.f32.mxu0 0.0
  %126 = vmatmul.mubr.f32.gmra.mrb[0].mxu0 %v21
  %v127 = vpop.f32.mrb[0].mxu0
  %v128 = vadd.f32 0.0, %v127
  %v129 = vpop.f32.mrb[0].mxu0
  %130 = vmatprep.mubr.f32.mxu0 0.0
  %131 = vmatmul.mubr.f32.gmra.mrb[0].mxu0 %v22
  %v132 = vpop.f32.mrb[0].mxu0
  %v133 = vadd.f32 0.0, %v132
  %v134 = vpop.f32.mrb[0].mxu0
  %135 = vmatprep.mubr.f32.mxu0 0.0
  %136 = vmatmul.mubr.f32.gmra.mrb[0].mxu0 %v23
  %v137 = vpop.f32.mrb[0].mxu0
  %v138 = vadd.f32 0.0, %v137
  %v139 = vpop.f32.mrb[0].mxu0
  %140 = vmatprep.mubr.f32.mxu0 0.0
  %141 = vmatmul.mubr.f32.gmra.mrb[0].mxu0 %v24
  %v142 = vpop.f32.mrb[0].mxu0
  %v143 = vadd.f32 0.0, %v142
  %v144 = vpop.f32.mrb[0].mxu0
  %145 = vdwg.mxu0
  %s146 = scalar_lea.vmem %s1, 128
  %v147 = vld [vmem:[%s146] sm:$0xff]
  %v148 = vld [vmem:[%s146 + $0x8] sm:$0xff]
  %v149 = vld [vmem:[%s146 + $0x10] sm:$0xff]
  %v150 = vld [vmem:[%s146 + $0x18] sm:$0xff]
  %v151 = vld [vmem:[%s146 + $0x20] sm:$0xff]
  %v152 = vld [vmem:[%s146 + $0x28] sm:$0xff]
  %v153 = vld [vmem:[%s146 + $0x30] sm:$0xff]
  %v154 = vld [vmem:[%s146 + $0x38] sm:$0xff]
  %v155 = vld [vmem:[%s146 + $0x40] sm:$0xff]
  %v156 = vld [vmem:[%s146 + $0x48] sm:$0xff]
  %v157 = vld [vmem:[%s146 + $0x50] sm:$0xff]
  %v158 = vld [vmem:[%s146 + $0x58] sm:$0xff]
  %v159 = vld [vmem:[%s146 + $0x60] sm:$0xff]
  %v160 = vld [vmem:[%s146 + $0x68] sm:$0xff]
  %v161 = vld [vmem:[%s146 + $0x70] sm:$0xff]
  %v162 = vld [vmem:[%s146 + $0x78] sm:$0xff]
  %163 = vmatprep.subr.mxu0 0.0
  %164 = vmatpush1.msra.mxu0 %v147
  %165 = vmatprep.subr.mxu0 0.0
  %166 = vmatpush1.msra.mxu0 %v148
  %167 = vmatprep.subr.mxu0 0.0
  %168 = vmatpush1.msra.mxu0 %v149
  %169 = vmatprep.subr.mxu0 0.0
  %170 = vmatpush1.msra.mxu0 %v150
  %171 = vmatprep.subr.mxu0 0.0
  %172 = vmatpush1.msra.mxu0 %v151
  %173 = vmatprep.subr.mxu0 0.0
  %174 = vmatpush1.msra.mxu0 %v152
  %175 = vmatprep.subr.mxu0 0.0
  %176 = vmatpush1.msra.mxu0 %v153
  %177 = vmatprep.subr.mxu0 0.0
  %178 = vmatpush1.msra.mxu0 %v154
  %179 = vmatprep.subr.mxu0 0.0
  %180 = vmatpush1.msra.mxu0 %v155
  %181 = vmatprep.subr.mxu0 0.0
  %182 = vmatpush1.msra.mxu0 %v156
  %183 = vmatprep.subr.mxu0 0.0
  %184 = vmatpush1.msra.mxu0 %v157
  %185 = vmatprep.subr.mxu0 0.0
  %186 = vmatpush1.msra.mxu0 %v158
  %187 = vmatprep.subr.mxu0 0.0
  %188 = vmatpush1.msra.mxu0 %v159
  %189 = vmatprep.subr.mxu0 0.0
  %190 = vmatpush1.msra.mxu0 %v160
  %191 = vmatprep.subr.mxu0 0.0
  %192 = vmatpush1.msra.mxu0 %v161
  %193 = vmatprep.subr.mxu0 0.0
  %194 = vmatpush1.msra.mxu0 %v162
  %195 = vmatprep.subr.mxu0 0.0
  %196 = vmatpush1.msra.mxu0 0.0
  %197 = vmatprep.subr.mxu0 0.0
  %198 = vmatpush1.msra.mxu0 0.0
  %199 = vmatprep.subr.mxu0 0.0
  %200 = vmatpush1.msra.mxu0 0.0
  %201 = vmatprep.subr.mxu0 0.0
  %202 = vmatpush1.msra.mxu0 0.0
  %203 = vmatprep.subr.mxu0 0.0
  %204 = vmatpush1.msra.mxu0 0.0
  %205 = vmatprep.subr.mxu0 0.0
  %206 = vmatpush1.msra.mxu0 0.0
  %207 = vmatprep.subr.mxu0 0.0
  %208 = vmatpush1.msra.mxu0 0.0
  %209 = vmatprep.subr.mxu0 0.0
  %210 = vmatpush1.msra.mxu0 0.0
  %211 = vmatprep.subr.mxu0 0.0
  %212 = vmatpush1.msra.mxu0 0.0
  %213 = vmatprep.subr.mxu0 0.0
  %214 = vmatpush1.msra.mxu0 0.0
  %215 = vmatprep.subr.mxu0 0.0
  %216 = vmatpush1.msra.mxu0 0.0
  %217 = vmatprep.subr.mxu0 0.0
  %218 = vmatpush1.msra.mxu0 0.0
  %219 = vmatprep.subr.mxu0 0.0
  %220 = vmatpush1.msra.mxu0 0.0
  %221 = vmatprep.subr.mxu0 0.0
  %222 = vmatpush1.msra.mxu0 0.0
  %223 = vmatprep.subr.mxu0 0.0
  %224 = vmatpush1.msra.mxu0 0.0
  %225 = vmatprep.subr.mxu0 0.0
  %226 = vmatpush1.msra.mxu0 0.0
  %227 = vmatprep.mubr.f32.mxu0 0.0
  %228 = vmatmul.mubr.f32.gmra.mrb[0].mxu0 %v17
  %v229 = vpop.f32.mrb[0].mxu0
  %v230 = vadd.f32 0.0, %v229
  %v231 = vpop.f32.mrb[0].mxu0
  %232 = vmatprep.mubr.f32.mxu0 0.0
  %233 = vmatmul.mubr.f32.gmra.mrb[0].mxu0 %v18
  %v234 = vpop.f32.mrb[0].mxu0
  %v235 = vadd.f32 0.0, %v234
  %v236 = vpop.f32.mrb[0].mxu0
  %237 = vmatprep.mubr.f32.mxu0 0.0
  %238 = vmatmul.mubr.f32.gmra.mrb[0].mxu0 %v19
  %v239 = vpop.f32.mrb[0].mxu0
  %v240 = vadd.f32 0.0, %v239
  %v241 = vpop.f32.mrb[0].mxu0
  %242 = vmatprep.mubr.f32.mxu0 0.0
  %243 = vmatmul.mubr.f32.gmra.mrb[0].mxu0 %v20
  %v244 = vpop.f32.mrb[0].mxu0
  %v245 = vadd.f32 0.0, %v244
  %v246 = vpop.f32.mrb[0].mxu0
  %247 = vmatprep.mubr.f32.mxu0 0.0
  %248 = vmatmul.mubr.f32.gmra.mrb[0].mxu0 %v21
  %v249 = vpop.f32.mrb[0].mxu0
  %v250 = vadd.f32 0.0, %v249
  %v251 = vpop.f32.mrb[0].mxu0
  %252 = vmatprep.mubr.f32.mxu0 0.0
  %253 = vmatmul.mubr.f32.gmra.mrb[0].mxu0 %v22
  %v254 = vpop.f32.mrb[0].mxu0
  %v255 = vadd.f32 0.0, %v254
  %v256 = vpop.f32.mrb[0].mxu0
  %257 = vmatprep.mubr.f32.mxu0 0.0
  %258 = vmatmul.mubr.f32.gmra.mrb[0].mxu0 %v23
  %v259 = vpop.f32.mrb[0].mxu0
  %v260 = vadd.f32 0.0, %v259
  %v261 = vpop.f32.mrb[0].mxu0
  %262 = vmatprep.mubr.f32.mxu0 0.0
  %263 = vmatmul.mubr.f32.gmra.mrb[0].mxu0 %v24
  %v264 = vpop.f32.mrb[0].mxu0
  %v265 = vadd.f32 0.0, %v264
  %v266 = vpop.f32.mrb[0].mxu0
  %267 = vdwg.mxu0
  %s268 = scalar_lea.vmem %s1, 256
  %v269 = vld [vmem:[%s268] sm:$0xff]
  %v270 = vld [vmem:[%s268 + $0x8] sm:$0xff]
  %v271 = vld [vmem:[%s268 + $0x10] sm:$0xff]
  %v272 = vld [vmem:[%s268 + $0x18] sm:$0xff]
  %v273 = vld [vmem:[%s268 + $0x20] sm:$0xff]
  %v274 = vld [vmem:[%s268 + $0x28] sm:$0xff]
  %v275 = vld [vmem:[%s268 + $0x30] sm:$0xff]
  %v276 = vld [vmem:[%s268 + $0x38] sm:$0xff]
  %v277 = vld [vmem:[%s268 + $0x40] sm:$0xff]
  %v278 = vld [vmem:[%s268 + $0x48] sm:$0xff]
  %v279 = vld [vmem:[%s268 + $0x50] sm:$0xff]
  %v280 = vld [vmem:[%s268 + $0x58] sm:$0xff]
  %v281 = vld [vmem:[%s268 + $0x60] sm:$0xff]
  %v282 = vld [vmem:[%s268 + $0x68] sm:$0xff]
  %v283 = vld [vmem:[%s268 + $0x70] sm:$0xff]
  %v284 = vld [vmem:[%s268 + $0x78] sm:$0xff]
  %285 = vmatprep.subr.mxu0 0.0
  %286 = vmatpush1.msra.mxu0 %v269
  %287 = vmatprep.subr.mxu0 0.0
  %288 = vmatpush1.msra.mxu0 %v270
  %289 = vmatprep.subr.mxu0 0.0
  %290 = vmatpush1.msra.mxu0 %v271
  %291 = vmatprep.subr.mxu0 0.0
  %292 = vmatpush1.msra.mxu0 %v272
  %293 = vmatprep.subr.mxu0 0.0
  %294 = vmatpush1.msra.mxu0 %v273
  %295 = vmatprep.subr.mxu0 0.0
  %296 = vmatpush1.msra.mxu0 %v274
  %297 = vmatprep.subr.mxu0 0.0
  %298 = vmatpush1.msra.mxu0 %v275
  %299 = vmatprep.subr.mxu0 0.0
  %300 = vmatpush1.msra.mxu0 %v276
  %301 = vmatprep.subr.mxu0 0.0
  %302 = vmatpush1.msra.mxu0 %v277
  %303 = vmatprep.subr.mxu0 0.0
  %304 = vmatpush1.msra.mxu0 %v278
  %305 = vmatprep.subr.mxu0 0.0
  %306 = vmatpush1.msra.mxu0 %v279
  %307 = vmatprep.subr.mxu0 0.0
  %308 = vmatpush1.msra.mxu0 %v280
  %309 = vmatprep.subr.mxu0 0.0
  %310 = vmatpush1.msra.mxu0 %v281
  %311 = vmatprep.subr.mxu0 0.0
  %312 = vmatpush1.msra.mxu0 %v282
  %313 = vmatprep.subr.mxu0 0.0
  %314 = vmatpush1.msra.mxu0 %v283
  %315 = vmatprep.subr.mxu0 0.0
  %316 = vmatpush1.msra.mxu0 %v284
  %317 = vmatprep.subr.mxu0 0.0
  %318 = vmatpush1.msra.mxu0 0.0
  %319 = vmatprep.subr.mxu0 0.0
  %320 = vmatpush1.msra.mxu0 0.0
  %321 = vmatprep.subr.mxu0 0.0
  %322 = vmatpush1.msra.mxu0 0.0
  %323 = vmatprep.subr.mxu0 0.0
  %324 = vmatpush1.msra.mxu0 0.0
  %325 = vmatprep.subr.mxu0 0.0
  %326 = vmatpush1.msra.mxu0 0.0
  %327 = vmatprep.subr.mxu0 0.0
  %328 = vmatpush1.msra.mxu0 0.0
  %329 = vmatprep.subr.mxu0 0.0
  %330 = vmatpush1.msra.mxu0 0.0
  %331 = vmatprep.subr.mxu0 0.0
  %332 = vmatpush1.msra.mxu0 0.0
  %333 = vmatprep.subr.mxu0 0.0
  %334 = vmatpush1.msra.mxu0 0.0
  %335 = vmatprep.subr.mxu0 0.0
  %336 = vmatpush1.msra.mxu0 0.0
  %337 = vmatprep.subr.mxu0 0.0
  %338 = vmatpush1.msra.mxu0 0.0
  %339 = vmatprep.subr.mxu0 0.0
  %340 = vmatpush1.msra.mxu0 0.0
  %341 = vmatprep.subr.mxu0 0.0
  %342 = vmatpush1.msra.mxu0 0.0
  %343 = vmatprep.subr.mxu0 0.0
  %344 = vmatpush1.msra.mxu0 0.0
  %345 = vmatprep.subr.mxu0 0.0
  %346 = vmatpush1.msra.mxu0 0.0
  %347 = vmatprep.subr.mxu0 0.0
  %348 = vmatpush1.msra.mxu0 0.0
  %349 = vmatprep.mubr.f32.mxu0 0.0
  %350 = vmatmul.mubr.f32.gmra.mrb[0].mxu0 %v17
  %v351 = vpop.f32.mrb[0].mxu0
  %v352 = vadd.f32 0.0, %v351
  %v353 = vpop.f32.mrb[0].mxu0
  %354 = vmatprep.mubr.f32.mxu0 0.0
  %355 = vmatmul.mubr.f32.gmra.mrb[0].mxu0 %v18
  %v356 = vpop.f32.mrb[0].mxu0
  %v357 = vadd.f32 0.0, %v356
  %v358 = vpop.f32.mrb[0].mxu0
  %359 = vmatprep.mubr.f32.mxu0 0.0
  %360 = vmatmul.mubr.f32.gmra.mrb[0].mxu0 %v19
  %v361 = vpop.f32.mrb[0].mxu0
  %v362 = vadd.f32 0.0, %v361
  %v363 = vpop.f32.mrb[0].mxu0
  %364 = vmatprep.mubr.f32.mxu0 0.0
  %365 = vmatmul.mubr.f32.gmra.mrb[0].mxu0 %v20
  %v366 = vpop.f32.mrb[0].mxu0
  %v367 = vadd.f32 0.0, %v366
  %v368 = vpop.f32.mrb[0].mxu0
  %369 = vmatprep.mubr.f32.mxu0 0.0
  %370 = vmatmul.mubr.f32.gmra.mrb[0].mxu0 %v21
  %v371 = vpop.f32.mrb[0].mxu0
  %v372 = vadd.f32 0.0, %v371
  %v373 = vpop.f32.mrb[0].mxu0
  %374 = vmatprep.mubr.f32.mxu0 0.0
  %375 = vmatmul.mubr.f32.gmra.mrb[0].mxu0 %v22
  %v376 = vpop.f32.mrb[0].mxu0
  %v377 = vadd.f32 0.0, %v376
  %v378 = vpop.f32.mrb[0].mxu0
  %379 = vmatprep.mubr.f32.mxu0 0.0
  %380 = vmatmul.mubr.f32.gmra.mrb[0].mxu0 %v23
  %v381 = vpop.f32.mrb[0].mxu0
  %v382 = vadd.f32 0.0, %v381
  %v383 = vpop.f32.mrb[0].mxu0
  %384 = vmatprep.mubr.f32.mxu0 0.0
  %385 = vmatmul.mubr.f32.gmra.mrb[0].mxu0 %v24
  %v386 = vpop.f32.mrb[0].mxu0
  %v387 = vadd.f32 0.0, %v386
  %v388 = vpop.f32.mrb[0].mxu0
  %389 = vdwg.mxu0
  %v390 = vld [vmem:[%s2] sm:$0x1]
  %v391 = vlaneseq
  %v392 = vshrl.u32 %v391, 7
  %v393 = vsub.s32 0, %v392
  %v394 = vrot.slane %v390, %v393
  %v395 = vadd.f32 %v230, %v394
  %v396 = vadd.f32 %v235, %v394
  %v397 = vadd.f32 %v240, %v394
  %v398 = vadd.f32 %v245, %v394
  %v399 = vadd.f32 %v250, %v394
  %v400 = vadd.f32 %v255, %v394
  %v401 = vadd.f32 %v260, %v394
  %v402 = vadd.f32 %v265, %v394
  %v403 = vxor.u32 %v395, 2147483648
  %v404 = vxor.u32 %v396, 2147483648
  %v405 = vxor.u32 %v397, 2147483648
  %v406 = vxor.u32 %v398, 2147483648
  %v407 = vxor.u32 %v399, 2147483648
  %v408 = vxor.u32 %v400, 2147483648
  %v409 = vxor.u32 %v401, 2147483648
  %v410 = vxor.u32 %v402, 2147483648
  %v411 = vmul.f32 %v403, 1.442695
  %v412 = vpow.pop %v411
  %v413 = vmul.f32 %v404, 1.442695
  %v414 = vpow.pop %v413
  %v415 = vmul.f32 %v405, 1.442695
  %v416 = vpow.pop %v415
  %v417 = vmul.f32 %v406, 1.442695
  %v418 = vpow.pop %v417
  %v419 = vmul.f32 %v407, 1.442695
  %v420 = vpow.pop %v419
  %v421 = vmul.f32 %v408, 1.442695
  %v422 = vpow.pop %v421
  %v423 = vmul.f32 %v409, 1.442695
  %v424 = vpow.pop %v423
  %v425 = vmul.f32 %v410, 1.442695
  %v426 = vpow.pop %v425
  %v427 = vadd.f32 %v412, 1.0
  %v428 = vadd.f32 %v414, 1.0
  %v429 = vadd.f32 %v416, 1.0
  %v430 = vadd.f32 %v418, 1.0
  %v431 = vadd.f32 %v420, 1.0
  %v432 = vadd.f32 %v422, 1.0
  %v433 = vadd.f32 %v424, 1.0
  %v434 = vadd.f32 %v426, 1.0
  %v435 = vrcp.pop %v427
  %v436 = vmul.f32 1.0, %v435
  %v437 = vrcp.pop %v428
  %v438 = vmul.f32 1.0, %v437
  %v439 = vrcp.pop %v429
  %v440 = vmul.f32 1.0, %v439
  %v441 = vrcp.pop %v430
  %v442 = vmul.f32 1.0, %v441
  %v443 = vrcp.pop %v431
  %v444 = vmul.f32 1.0, %v443
  %v445 = vrcp.pop %v432
  %v446 = vmul.f32 1.0, %v445
  %v447 = vrcp.pop %v433
  %v448 = vmul.f32 1.0, %v447
  %v449 = vrcp.pop %v434
  %v450 = vmul.f32 1.0, %v449
  %v451 = vld [vmem:[%s2 + $0x1] sm:$0x1]
  %v452 = vlaneseq
  %v453 = vshrl.u32 %v452, 7
  %v454 = vsub.s32 0, %v453
  %v455 = vrot.slane %v451, %v454
  %v456 = vadd.f32 %v352, %v455
  %v457 = vadd.f32 %v357, %v455
  %v458 = vadd.f32 %v362, %v455
  %v459 = vadd.f32 %v367, %v455
  %v460 = vadd.f32 %v372, %v455
  %v461 = vadd.f32 %v377, %v455
  %v462 = vadd.f32 %v382, %v455
  %v463 = vadd.f32 %v387, %v455
  %v464 = vxor.u32 %v456, 2147483648
  %v465 = vxor.u32 %v457, 2147483648
  %v466 = vxor.u32 %v458, 2147483648
  %v467 = vxor.u32 %v459, 2147483648
  %v468 = vxor.u32 %v460, 2147483648
  %v469 = vxor.u32 %v461, 2147483648
  %v470 = vxor.u32 %v462, 2147483648
  %v471 = vxor.u32 %v463, 2147483648
  %v472 = vmul.f32 %v464, 1.442695
  %v473 = vpow.pop %v472
  %v474 = vmul.f32 %v465, 1.442695
  %v475 = vpow.pop %v474
  %v476 = vmul.f32 %v466, 1.442695
  %v477 = vpow.pop %v476
  %v478 = vmul.f32 %v467, 1.442695
  %v479 = vpow.pop %v478
  %v480 = vmul.f32 %v468, 1.442695
  %v481 = vpow.pop %v480
  %v482 = vmul.f32 %v469, 1.442695
  %v483 = vpow.pop %v482
  %v484 = vmul.f32 %v470, 1.442695
  %v485 = vpow.pop %v484
  %v486 = vmul.f32 %v471, 1.442695
  %v487 = vpow.pop %v486
  %v488 = vadd.f32 %v473, 1.0
  %v489 = vadd.f32 %v475, 1.0
  %v490 = vadd.f32 %v477, 1.0
  %v491 = vadd.f32 %v479, 1.0
  %v492 = vadd.f32 %v481, 1.0
  %v493 = vadd.f32 %v483, 1.0
  %v494 = vadd.f32 %v485, 1.0
  %v495 = vadd.f32 %v487, 1.0
  %v496 = vrcp.pop %v488
  %v497 = vmul.f32 1.0, %v496
  %v498 = vrcp.pop %v489
  %v499 = vmul.f32 1.0, %v498
  %v500 = vrcp.pop %v490
  %v501 = vmul.f32 1.0, %v500
  %v502 = vrcp.pop %v491
  %v503 = vmul.f32 1.0, %v502
  %v504 = vrcp.pop %v492
  %v505 = vmul.f32 1.0, %v504
  %v506 = vrcp.pop %v493
  %v507 = vmul.f32 1.0, %v506
  %v508 = vrcp.pop %v494
  %v509 = vmul.f32 1.0, %v508
  %v510 = vrcp.pop %v495
  %v511 = vmul.f32 1.0, %v510
  %v512 = vsub.f32 1.0, %v436
  %v513 = vsub.f32 1.0, %v438
  %v514 = vsub.f32 1.0, %v440
  %v515 = vsub.f32 1.0, %v442
  %v516 = vsub.f32 1.0, %v444
  %v517 = vsub.f32 1.0, %v446
  %v518 = vsub.f32 1.0, %v448
  %v519 = vsub.f32 1.0, %v450
  %v520 = vmul.f32 %v512, %v108
  %v521 = vmul.f32 %v513, %v113
  %v522 = vmul.f32 %v514, %v118
  %v523 = vmul.f32 %v515, %v123
  %v524 = vmul.f32 %v516, %v128
  %v525 = vmul.f32 %v517, %v133
  %v526 = vmul.f32 %v518, %v138
  %v527 = vmul.f32 %v519, %v143
  %528 = vst [vmem:[%s3] sm:$0xff] %v436
  %529 = vst [vmem:[%s3 + $0x8] sm:$0xff] %v438
  %530 = vst [vmem:[%s3 + $0x10] sm:$0xff] %v440
  %531 = vst [vmem:[%s3 + $0x18] sm:$0xff] %v442
  %532 = vst [vmem:[%s3 + $0x20] sm:$0xff] %v444
  %533 = vst [vmem:[%s3 + $0x28] sm:$0xff] %v446
  %534 = vst [vmem:[%s3 + $0x30] sm:$0xff] %v448
  %535 = vst [vmem:[%s3 + $0x38] sm:$0xff] %v450
  %536 = vst [vmem:[%s4] sm:$0xff] %v520
  %537 = vst [vmem:[%s4 + $0x8] sm:$0xff] %v521
  %538 = vst [vmem:[%s4 + $0x10] sm:$0xff] %v522
  %539 = vst [vmem:[%s4 + $0x18] sm:$0xff] %v523
  %540 = vst [vmem:[%s4 + $0x20] sm:$0xff] %v524
  %541 = vst [vmem:[%s4 + $0x28] sm:$0xff] %v525
  %542 = vst [vmem:[%s4 + $0x30] sm:$0xff] %v526
  %543 = vst [vmem:[%s4 + $0x38] sm:$0xff] %v527
  %544 = vst [vmem:[%s5] sm:$0xff] %v497
  %545 = vst [vmem:[%s5 + $0x8] sm:$0xff] %v499
  %546 = vst [vmem:[%s5 + $0x10] sm:$0xff] %v501
  %547 = vst [vmem:[%s5 + $0x18] sm:$0xff] %v503
  %548 = vst [vmem:[%s5 + $0x20] sm:$0xff] %v505
  %549 = vst [vmem:[%s5 + $0x28] sm:$0xff] %v507
  %550 = vst [vmem:[%s5 + $0x30] sm:$0xff] %v509
  %551 = vst [vmem:[%s5 + $0x38] sm:$0xff] %v511
  // Predicated region
  $region14: #{sru_layer_forward.2} parent=0 // pred_check
    _
  $region15: #{sru_layer_forward.2} parent=0 // pred_check_branch
    %553 = sbr.rel (0) target = $region17
  $region16: #{sru_layer_forward.2} parent=0 // pred_region
    _
  $region17: #{sru_layer_forward.2} parent=0 // pred_fallthru
    _
  // Predicated region
  $region18: #{sru_layer_forward.2} parent=0 // pred_check
    _
  $region19: #{sru_layer_forward.2} parent=0 // pred_check_branch
    %555 = sbr.rel (0) target = $region21
  $region20: #{sru_layer_forward.2} parent=0 // pred_region
    _
  $region21: #{sru_layer_forward.2} parent=0 // pred_fallthru
    _
  // Predicated region
  $region22: #{sru_layer_forward.2} parent=0 // pred_check
    _
  $region23: #{sru_layer_forward.2} parent=0 // pred_check_branch
    %557 = sbr.rel (0) target = $region25
  $region24: #{sru_layer_forward.2} parent=0 // pred_region
    _
  $region25: #{sru_layer_forward.2} parent=0 // pred_fallthru
    _
  // Predicated region
  $region26: #{sru_layer_forward.2} parent=0 // pred_check
    _
  $region27: #{sru_layer_forward.2} parent=0 // pred_check_branch
    %559 = sbr.rel (0) target = $region29
  $region28: #{sru_layer_forward.2} parent=0 // pred_region
    _
  $region29: #{sru_layer_forward.2} parent=0 // pred_fallthru
    _
  // Predicated region
  $region30: #{sru_layer_forward.2} parent=0 // pred_check
    _
  $region31: #{sru_layer_forward.2} parent=0 // pred_check_branch
    %561 = sbr.rel (0) target = $region33
  $region32: #{sru_layer_forward.2} parent=0 // pred_region
    _
  $region33: #{sru_layer_forward.2} parent=0 // pred_fallthru
    _
  // Predicated region
  $region34: #{sru_layer_forward.2} parent=0 // pred_check
    _
  $region35: #{sru_layer_forward.2} parent=0 // pred_check_branch
    %563 = sbr.rel (0) target = $region37
  $region36: #{sru_layer_forward.2} parent=0 // pred_region
    _
  $region37: #{sru_layer_forward.2} parent=0 // pred_fallthru
    _

// kernel: sru_layer_forward.3
$region0: #{sru_layer_forward.3}
  #allocation0 [shape = 'u32[]', space=smem, size = 0x4, offset = 0x4, fixed_abs, tag = 'smem constant byte address 0x4 - core index']
  #allocation1 [shape = 'u32[144,128]{1,0:T(1,128)}', space=vmem, size = 0x12000, scoped, tag = 'internal scratch']
  %s0 = inlined_call_operand.vmem [shape: f32[8,8,128], index: 0, kind: input, shape index: {}]
  %s1 = inlined_call_operand.vmem [shape: f32[8,8,128], index: 1, kind: input, shape index: {}]
  %s2 = inlined_call_operand.vmem [shape: f32[8,8,128], index: 2, kind: input, shape index: {}]
  %s3 = inlined_call_operand.vmem [shape: f32[8,8,128], index: 3, kind: input, shape index: {}]
  %s4 = inlined_call_operand.vmem [shape: f32[8,8,128], index: 4, kind: output, shape index: {0}]
  %s5 = inlined_call_operand.vmem [shape: f32[8,128], index: 5, kind: output, shape index: {1}]
  %6 = xla_tuple %s4, %s5
  %s7 = sld [smem:[#allocation0]]
  $region38: #{sru_layer_forward.3} parent=0
    _
  %s9 = ssub.s32 1, %s7
  %s10 = scalar_select 0, %s9, %s7
  // Predicated region
  $region2: #{sru_layer_forward.3} parent=0 // pred_check
    _
  $region3: #{sru_layer_forward.3} parent=0 // pred_check_branch
    %12 = sbr.rel (0) target = $region5
  $region4: #{sru_layer_forward.3} parent=0 // pred_region
    _
  $region5: #{sru_layer_forward.3} parent=0 // pred_fallthru
    _
  // Predicated region
  $region6: #{sru_layer_forward.3} parent=0 // pred_check
    _
  $region7: #{sru_layer_forward.3} parent=0 // pred_check_branch
    %14 = sbr.rel (0) target = $region9
  $region8: #{sru_layer_forward.3} parent=0 // pred_region
    _
  $region9: #{sru_layer_forward.3} parent=0 // pred_fallthru
    _
  // Predicated region
  $region10: #{sru_layer_forward.3} parent=0 // pred_check
    _
  $region11: #{sru_layer_forward.3} parent=0 // pred_check_branch
    %16 = sbr.rel (0) target = $region13
  $region12: #{sru_layer_forward.3} parent=0 // pred_region
    _
  $region13: #{sru_layer_forward.3} parent=0 // pred_fallthru
    _
  // Predicated region
  $region14: #{sru_layer_forward.3} parent=0 // pred_check
    _
  $region15: #{sru_layer_forward.3} parent=0 // pred_check_branch
    %18 = sbr.rel (0) target = $region17
  $region16: #{sru_layer_forward.3} parent=0 // pred_region
    _
  $region17: #{sru_layer_forward.3} parent=0 // pred_fallthru
    _
  %p19 = scmp.eq.s32.totalorder 0, 0
  // Predicated region
  $region18: #{sru_layer_forward.3} parent=0 // pred_check
    %p20 = pneg %p19
  $region19: #{sru_layer_forward.3} parent=0 // pred_check_branch
    %22 = sbr.rel (%p20) target = $region21
  $region20: #{sru_layer_forward.3} parent=0 // pred_region
    %23 = vst [vmem:[%s5] sm:$0xff] 0.0
  $region21: #{sru_layer_forward.3} parent=0 // pred_fallthru
    _
  %v24 = vld [vmem:[%s5] sm:$0xff]
  %v25 = vld [vmem:[%s0] sm:$0xff]
  %v26 = vmul.f32 %v25, %v24
  %v27 = vld [vmem:[%s1] sm:$0xff]
  %v28 = vadd.f32 %v26, %v27
  %v29 = vld [vmem:[%s2] sm:$0xff]
  %v30 = vtanh.pop %v28
  %v31 = vmul.f32 %v29, %v30
  %v32 = vsub.f32 1.0, %v29
  %v33 = vld [vmem:[%s3] sm:$0xff]
  %v34 = vmul.f32 %v32, %v33
  %v35 = vadd.f32 %v31, %v34
  %36 = vst [vmem:[%s4] sm:$0xff] %v35
  %s37 = scalar_lea.vmem %s0, 8
  %v38 = vld [vmem:[%s37] sm:$0xff]
  %v39 = vmul.f32 %v38, %v28
  %s40 = scalar_lea.vmem %s1, 8
  %v41 = vld [vmem:[%s40] sm:$0xff]
  %v42 = vadd.f32 %v39, %v41
  %s43 = scalar_lea.vmem %s2, 8
  %v44 = vld [vmem:[%s43] sm:$0xff]
  %v45 = vtanh.pop %v42
  %v46 = vmul.f32 %v44, %v45
  %v47 = vsub.f32 1.0, %v44
  %s48 = scalar_lea.vmem %s3, 8
  %v49 = vld [vmem:[%s48] sm:$0xff]
  %v50 = vmul.f32 %v47, %v49
  %v51 = vadd.f32 %v46, %v50
  %s52 = scalar_lea.vmem %s4, 8
  %53 = vst [vmem:[%s52] sm:$0xff] %v51
  %s54 = scalar_lea.vmem %s0, 16
  %v55 = vld [vmem:[%s54] sm:$0xff]
  %v56 = vmul.f32 %v55, %v42
  %s57 = scalar_lea.vmem %s1, 16
  %v58 = vld [vmem:[%s57] sm:$0xff]
  %v59 = vadd.f32 %v56, %v58
  %s60 = scalar_lea.vmem %s2, 16
  %v61 = vld [vmem:[%s60] sm:$0xff]
  %v62 = vtanh.pop %v59
  %v63 = vmul.f32 %v61, %v62
  %v64 = vsub.f32 1.0, %v61
  %s65 = scalar_lea.vmem %s3, 16
  %v66 = vld [vmem:[%s65] sm:$0xff]
  %v67 = vmul.f32 %v64, %v66
  %v68 = vadd.f32 %v63, %v67
  %s69 = scalar_lea.vmem %s4, 16
  %70 = vst [vmem:[%s69] sm:$0xff] %v68
  %s71 = scalar_lea.vmem %s0, 24
  %v72 = vld [vmem:[%s71] sm:$0xff]
  %v73 = vmul.f32 %v72, %v59
  %s74 = scalar_lea.vmem %s1, 24
  %v75 = vld [vmem:[%s74] sm:$0xff]
  %v76 = vadd.f32 %v73, %v75
  %s77 = scalar_lea.vmem %s2, 24
  %v78 = vld [vmem:[%s77] sm:$0xff]
  %v79 = vtanh.pop %v76
  %v80 = vmul.f32 %v78, %v79
  %v81 = vsub.f32 1.0, %v78
  %s82 = scalar_lea.vmem %s3, 24
  %v83 = vld [vmem:[%s82] sm:$0xff]
  %v84 = vmul.f32 %v81, %v83
  %v85 = vadd.f32 %v80, %v84
  %s86 = scalar_lea.vmem %s4, 24
  %87 = vst [vmem:[%s86] sm:$0xff] %v85
  %s88 = scalar_lea.vmem %s0, 32
  %v89 = vld [vmem:[%s88] sm:$0xff]
  %v90 = vmul.f32 %v89, %v76
  %s91 = scalar_lea.vmem %s1, 32
  %v92 = vld [vmem:[%s91] sm:$0xff]
  %v93 = vadd.f32 %v90, %v92
  %s94 = scalar_lea.vmem %s2, 32
  %v95 = vld [vmem:[%s94] sm:$0xff]
  %v96 = vtanh.pop %v93
  %v97 = vmul.f32 %v95, %v96
  %v98 = vsub.f32 1.0, %v95
  %s99 = scalar_lea.vmem %s3, 32
  %v100 = vld [vmem:[%s99] sm:$0xff]
  %v101 = vmul.f32 %v98, %v100
  %v102 = vadd.f32 %v97, %v101
  %s103 = scalar_lea.vmem %s4, 32
  %104 = vst [vmem:[%s103] sm:$0xff] %v102
  %s105 = scalar_lea.vmem %s0, 40
  %v106 = vld [vmem:[%s105] sm:$0xff]
  %v107 = vmul.f32 %v106, %v93
  %s108 = scalar_lea.vmem %s1, 40
  %v109 = vld [vmem:[%s108] sm:$0xff]
  %v110 = vadd.f32 %v107, %v109
  %s111 = scalar_lea.vmem %s2, 40
  %v112 = vld [vmem:[%s111] sm:$0xff]
  %v113 = vtanh.pop %v110
  %v114 = vmul.f32 %v112, %v113
  %v115 = vsub.f32 1.0, %v112
  %s116 = scalar_lea.vmem %s3, 40
  %v117 = vld [vmem:[%s116] sm:$0xff]
  %v118 = vmul.f32 %v115, %v117
  %v119 = vadd.f32 %v114, %v118
  %s120 = scalar_lea.vmem %s4, 40
  %121 = vst [vmem:[%s120] sm:$0xff] %v119
  %s122 = scalar_lea.vmem %s0, 48
  %v123 = vld [vmem:[%s122] sm:$0xff]
  %v124 = vmul.f32 %v123, %v110
  %s125 = scalar_lea.vmem %s1, 48
  %v126 = vld [vmem:[%s125] sm:$0xff]
  %v127 = vadd.f32 %v124, %v126
  %s128 = scalar_lea.vmem %s2, 48
  %v129 = vld [vmem:[%s128] sm:$0xff]
  %v130 = vtanh.pop %v127
  %v131 = vmul.f32 %v129, %v130
  %v132 = vsub.f32 1.0, %v129
  %s133 = scalar_lea.vmem %s3, 48
  %v134 = vld [vmem:[%s133] sm:$0xff]
  %v135 = vmul.f32 %v132, %v134
  %v136 = vadd.f32 %v131, %v135
  %s137 = scalar_lea.vmem %s4, 48
  %138 = vst [vmem:[%s137] sm:$0xff] %v136
  %s139 = scalar_lea.vmem %s0, 56
  %v140 = vld [vmem:[%s139] sm:$0xff]
  %v141 = vmul.f32 %v140, %v127
  %s142 = scalar_lea.vmem %s1, 56
  %v143 = vld [vmem:[%s142] sm:$0xff]
  %v144 = vadd.f32 %v141, %v143
  %s145 = scalar_lea.vmem %s2, 56
  %v146 = vld [vmem:[%s145] sm:$0xff]
  %v147 = vtanh.pop %v144
  %v148 = vmul.f32 %v146, %v147
  %v149 = vsub.f32 1.0, %v146
  %s150 = scalar_lea.vmem %s3, 56
  %v151 = vld [vmem:[%s150] sm:$0xff]
  %v152 = vmul.f32 %v149, %v151
  %v153 = vadd.f32 %v148, %v152
  %s154 = scalar_lea.vmem %s4, 56
  %155 = vst [vmem:[%s154] sm:$0xff] %v153
  %156 = vst [vmem:[%s5] sm:$0xff] %v144
  // Predicated region
  $region22: #{sru_layer_forward.3} parent=0 // pred_check
    _
  $region23: #{sru_layer_forward.3} parent=0 // pred_check_branch
    %158 = sbr.rel (0) target = $region25
  $region24: #{sru_layer_forward.3} parent=0 // pred_region
    _
  $region25: #{sru_layer_forward.3} parent=0 // pred_fallthru
    _
  // Predicated region
  $region26: #{sru_layer_forward.3} parent=0 // pred_check
    _
  $region27: #{sru_layer_forward.3} parent=0 // pred_check_branch
    %160 = sbr.rel (0) target = $region29
  $region28: #{sru_layer_forward.3} parent=0 // pred_region
    _
  $region29: #{sru_layer_forward.3} parent=0 // pred_fallthru
    _
  // Predicated region
  $region30: #{sru_layer_forward.3} parent=0 // pred_check
    _
  $region31: #{sru_layer_forward.3} parent=0 // pred_check_branch
    %162 = sbr.rel (0) target = $region33
  $region32: #{sru_layer_forward.3} parent=0 // pred_region
    _
  $region33: #{sru_layer_forward.3} parent=0 // pred_fallthru
    _
  // Predicated region
  $region34: #{sru_layer_forward.3} parent=0 // pred_check
    _
  $region35: #{sru_layer_forward.3} parent=0 // pred_check_branch
    %164 = sbr.rel (0) target = $region37
  $region36: #{sru_layer_forward.3} parent=0 // pred_region
    _
  $region37: #{sru_layer_forward.3} parent=0 // pred_fallthru
    _

</llo_original>
